<compile_context>
chip_gen: v7x
topology: tpu7x:2x2x1
jax: 0.10.0
libtpu: 0.0.40
codegen_flags: <defaults>
</compile_context>

<pallas_src>
import functools

import numpy as np
import jax
import jax.numpy as jnp
from jax import lax
from jax.experimental import pallas as pl
from jax.experimental.pallas import tpu as pltpu


def _pad8(n):
    return -(-n // 8) * 8


# -----------------------------------------------------------------------------
# Pallas kernel
# -----------------------------------------------------------------------------
def _make_dfc_kernel(cfg):
    (Cin, Cint, Cout, K, DIL, PAD, MULT, W, L, t_off, ww_off, sh_off) = cfg
    f32 = jnp.float32
    t1_, t2_, t4_, t5_ = t_off
    w3_, w6_, e_ = ww_off
    o1_, o2_, o3_, o4_, o5_, o6_ = sh_off

    def dw_conv(v, taps, unit):
        # v: (C, L).  Depthwise conv along one spatial axis, vectorized over channels
        # AND batch (batch folded into the lane axis):
        #   out[c, p] = sum_t taps[t, c, p] * v[c, p + (t*DIL - PAD)*unit]
        # taps already carry the 0/1 boundary mask and the folded BN scale, so each
        # tap is one roll (XLU) + one multiply (VPU).
        acc = None
        for t in range(K):
            s = (t * DIL - PAD) * unit
            rolled = v if s == 0 else pltpu.roll(v, (-s) % L, axis=1)  # out[p]=v[p+s]
            term = rolled * taps[t]
            acc = term if acc is None else acc + term
        return acc

    def kernel(x_ref, taps_ref, ww_ref, sh_ref, out_ref):
        x = x_ref[...].astype(f32)         # (Cin, L) — lane-dense, batch-merged
        taps = taps_ref[...]               # (K, Ctp, L) masked + BN-scaled taps
        ww = ww_ref[...]                   # packed 1x1 weights (+ group expansion)
        sh = sh_ref[...]                   # packed BN shifts, (Csh, 1)

        t1 = taps[:, t1_:t1_ + Cin, :]
        t2 = taps[:, t2_:t2_ + Cout, :]
        t4 = taps[:, t4_:t4_ + Cint, :]
        t5 = taps[:, t5_:t5_ + Cint, :]
        w3 = ww[w3_:w3_ + Cint, :Cin]      # conv3 weights, BN3 scale folded
        w6 = ww[w6_:w6_ + Cout, :Cint]     # conv6 weights, BN6 scale folded
        o1 = sh[o1_:o1_ + Cin]
        o2 = sh[o2_:o2_ + Cout]
        o3 = sh[o3_:o3_ + Cint]
        o4 = sh[o4_:o4_ + Cint]
        o5 = sh[o5_:o5_ + Cint]
        o6 = sh[o6_:o6_ + Cout]

        # ---------------- main branch ----------------
        m = jnp.dot(w3, x, preferred_element_type=f32)      # conv3 (1x1, MXU)
        m = jnp.maximum(m + o3, 0.0)                        # BN3 shift + ReLU
        m = dw_conv(m, t4, W) + o4                          # conv4 (k,1) dw + BN4
        m = dw_conv(m, t5, 1) + o5                          # conv5 (1,k) dw + BN5
        m = jnp.dot(w6, m, preferred_element_type=f32) + o6  # conv6 (1x1, MXU) + BN6

        # ---------------- residual branch ----------------
        r = dw_conv(x, t1, W) + o1                          # conv1 (k,1) dw + BN1
        if MULT > 1:
            # Group expansion (groups == Cin, each input channel feeds MULT outputs)
            # done as a tiny MXU matmul against a host-built 0/1 matrix — avoids
            # in-kernel sublane reshuffle / relayout copies.
            E = ww[e_:e_ + Cout, :Cin]
            r = jnp.dot(E, r, preferred_element_type=f32)
        r = dw_conv(r, t2, 1) + o2                          # conv2 (1,k) grouped + BN2
        # TODO(synk): Dropout2d on the residual is skipped (module default dropout_rate == 0).

        out_ref[...] = jnp.maximum(m + r, 0.0).astype(out_ref.dtype)  # one unmasked vst

    return kernel


# -----------------------------------------------------------------------------
# Block-batch heuristic (generation-aware VMEM budget)
# -----------------------------------------------------------------------------
def _vmem_capacity_bytes():
    try:
        info = pltpu.get_tpu_info()
        cap = getattr(info, "vmem_capacity_bytes", None)
        if cap:
            return int(cap)
    except Exception:
        pass
    return 64 << 20  # conservative minimum across v5e/v6e/v7x


def _choose_block_batch(B, HW, Cin, Cout, Ctp, K):
    vmem_cap = _vmem_capacity_bytes()
    budget = max(4 << 20, vmem_cap // 4)  # headroom for double-buffering + compiler scratch

    def block_bytes(bt):
        L = bt * HW
        # double-buffered input/output blocks + (conservatively 2x) tap slab
        return 4 * L * (2 * (Cin + Cout) + 2 * K * Ctp)

    best = 1
    for bt in range(1, B + 1):
        if B % bt == 0 and block_bytes(bt) <= budget:
            best = bt
    # Only split the grid (for megacore / v7x) when per-image work is heavy enough to
    # amortize the ~0.35us per-step overhead; tiny problems run as a single step.
    if best == B and B >= 2 and block_bytes(1) >= (4 << 20):
        for bt in range(B // 2, 0, -1):
            if B % bt == 0:
                best = bt
                break
    return best, block_bytes(best), vmem_cap


# -----------------------------------------------------------------------------
# Host-side packing helpers
# -----------------------------------------------------------------------------
def _pack_sections(pieces, axis):
    """Concatenate along `axis`, padding each piece to a multiple of 8 rows so every
    in-kernel static slice starts on a sublane-tile boundary.  Returns (packed, offsets)."""
    offs, padded, off = [], [], 0
    for a in pieces:
        c = a.shape[axis]
        offs.append(off)
        pc = _pad8(c)
        if pc != c:
            pw = [(0, 0)] * a.ndim
            pw[axis] = (0, pc - c)
            a = jnp.pad(a, pw)
        padded.append(a)
        off += pc
    return jnp.concatenate(padded, axis=axis), tuple(offs)


# -----------------------------------------------------------------------------
# Wrapper
# -----------------------------------------------------------------------------
def dfc_forward(x, params, *, kernel_size=3, stride=1, dilation=1):
    B, Cin, H, W = x.shape
    (w1, bn1, w2, bn2, w3, bn3, w4, bn4, w5, bn5, w6, bn6) = params
    Cout = w2.shape[0]
    Cint = w3.shape[0]
    K = kernel_size
    pad = int((K - 1) / 2 * dilation)
    Hout = (H + 2 * pad - dilation * (K - 1) - 1) // stride + 1
    Wout = (W + 2 * pad - dilation * (K - 1) - 1) // stride + 1
    if stride != 1 or Hout != H or Wout != W:
        # TODO(synk): strided / non-'same' (even kernel_size) configs are not implemented
        # in the roll+mask fast path.
        raise NotImplementedError(
            "dfc_forward: only stride=1 with 'same' padding (odd kernel_size) is supported")
    mult = Cout // Cin
    HW = H * W
    f32 = jnp.float32

    Ctp = _pad8(Cin) + _pad8(Cout) + 2 * _pad8(Cint)
    Bt, est_block_bytes, vmem_cap = _choose_block_batch(B, HW, Cin, Cout, Ctp, K)
    L = Bt * HW

    # --- boundary masks, tiled per-image along the merged Bt*HW lane axis ---------
    idx = np.arange(L)
    row, col = (idx % HW) // W, idx % W
    offs = [t * dilation - pad for t in range(K)]
    hmask = np.stack([((row + o) >= 0) & ((row + o) < H) for o in offs]).astype(np.float32)
    wmask = np.stack([((col + o) >= 0) & ((col + o) < W) for o in offs]).astype(np.float32)
    hmask_j = jnp.asarray(hmask)[:, None, :]   # (K, 1, L)
    wmask_j = jnp.asarray(wmask)[:, None, :]

    # --- masked, BN-scale-folded depthwise taps: (K, C, L) -------------------------
    def masked_taps(wc, scale, mask):          # wc: (C, K), scale: (C,), mask: (K,1,L)
        return jnp.transpose(scale[:, None] * wc)[:, :, None] * mask

    mt1 = masked_taps(w1, bn1[0], hmask_j)     # conv1 (k,1) dw, BN1 scale folded
    mt2 = masked_taps(w2, bn2[0], wmask_j)     # conv2 (1,k) grouped, BN2 scale folded
    mt4 = masked_taps(w4, bn4[0], hmask_j)     # conv4 (k,1) dw, BN4 scale folded
    mt5 = masked_taps(w5, bn5[0], wmask_j)     # conv5 (1,k) dw, BN5 scale folded
    taps, t_off = _pack_sections([mt1, mt2, mt4, mt5], axis=1)      # (K, Ctp, L)

    # --- packed 1x1 weights (BN scales folded) + group expansion matrix ------------
    w3s = bn3[0][:, None] * w3                                       # (Cint, Cin)
    w6s = bn6[0][:, None] * w6                                       # (Cout, Cint)
    w6s = jnp.pad(w6s, ((0, 0), (0, Cin - Cint))) if Cint < Cin else w6s
    E = np.zeros((Cout, Cin), np.float32)
    for g in range(Cin):
        E[g * mult:(g + 1) * mult, g] = 1.0                          # PyTorch group-major order
    ww, ww_off = _pack_sections([w3s, w6s, jnp.asarray(E)], axis=0)  # (rows, Cin)

    # --- packed BN shifts -----------------------------------------------------------
    sh, sh_off = _pack_sections(
        [bn1[1][:, None], bn2[1][:, None], bn3[1][:, None],
         bn4[1][:, None], bn5[1][:, None], bn6[1][:, None]], axis=0)  # (rows, 1)

    # --- batch-merged, lane-dense activation layout ---------------------------------
    x_cm = jnp.transpose(x, (1, 0, 2, 3)).reshape(Cin, B * HW)        # (Cin, B*HW)

    cfg = (Cin, Cint, Cout, K, dilation, pad, mult, W, L, t_off, ww_off, sh_off)
    kernel = _make_dfc_kernel(cfg)

    def _const_spec(a):
        nd = a.ndim
        return pl.BlockSpec(a.shape, lambda b, _nd=nd: (0,) * _nd)

    grid_steps = B // Bt
    dims = ("parallel",) if grid_steps > 1 else ("arbitrary",)
    cp_kwargs = dict(dimension_semantics=dims)
    if est_block_bytes > (30 << 20):
        cp_kwargs["vmem_limit_bytes"] = min(int(est_block_bytes * 1.5), int(vmem_cap * 0.9))

    out_flat = pl.pallas_call(
        kernel,
        out_shape=jax.ShapeDtypeStruct((Cout, B * HW), f32),
        grid=(grid_steps,),
        in_specs=[pl.BlockSpec((Cin, L), lambda b: (0, b)),
                  _const_spec(taps), _const_spec(ww), _const_spec(sh)],
        out_specs=pl.BlockSpec((Cout, L), lambda b: (0, b)),
        compiler_params=pltpu.CompilerParams(**cp_kwargs),
    )(x_cm, taps, ww, sh)

    return jnp.transpose(out_flat.reshape(Cout, B, Hout, Wout), (1, 0, 2, 3))


# -----------------------------------------------------------------------------
# Deterministic parameter construction (synthetic; BN folded to scale/shift)
# -----------------------------------------------------------------------------
def init_params(key, in_channels, out_channels, kernel_size=3):
    Cint = in_channels // 4
    ks = jax.random.split(key, 12)

    def w(k, shape, fan_in):
        return jax.random.normal(k, shape, jnp.float32) / jnp.sqrt(float(fan_in))

    def bn(k, c):
        k1, k2, k3, k4 = jax.random.split(k, 4)
        gamma = jax.random.uniform(k1, (c,), jnp.float32, 0.5, 1.5)
        beta = jax.random.normal(k2, (c,), jnp.float32) * 0.1
        mean = jax.random.normal(k3, (c,), jnp.float32) * 0.1
        var = jax.random.uniform(k4, (c,), jnp.float32, 0.5, 1.5)
        scale = gamma / jnp.sqrt(var + 1e-5)
        shift = beta - mean * scale
        return jnp.stack([scale, shift], axis=0)  # (2, c)

    w1 = w(ks[0], (in_channels, kernel_size), kernel_size)     # conv1: dw (k,1)
    w2 = w(ks[1], (out_channels, kernel_size), kernel_size)    # conv2: grouped (1,k)
    w3 = w(ks[2], (Cint, in_channels), in_channels)            # conv3: 1x1
    w4 = w(ks[3], (Cint, kernel_size), kernel_size)            # conv4: dw (k,1)
    w5 = w(ks[4], (Cint, kernel_size), kernel_size)            # conv5: dw (1,k)
    w6 = w(ks[5], (out_channels, Cint), Cint)                  # conv6: 1x1
    return (w1, bn(ks[6], in_channels), w2, bn(ks[7], out_channels),
            w3, bn(ks[8], Cint), w4, bn(ks[9], Cint),
            w5, bn(ks[10], Cint), w6, bn(ks[11], out_channels))


# -----------------------------------------------------------------------------
# Pure-JAX reference (for verification only)
# -----------------------------------------------------------------------------
def dfc_reference(x, params, *, kernel_size=3, stride=1, dilation=1):
    (w1, bn1, w2, bn2, w3, bn3, w4, bn4, w5, bn5, w6, bn6) = params
    Cin = x.shape[1]
    Cout = w2.shape[0]
    Cint = w3.shape[0]
    K = kernel_size
    pad = int((K - 1) / 2 * dilation)
    dn = ("NCHW", "OIHW", "NCHW")

    def bn_apply(y, bn):
        return y * bn[0][None, :, None, None] + bn[1][None, :, None, None]

    r = lax.conv_general_dilated(x, w1.reshape(Cin, 1, K, 1),
        window_strides=(stride, 1), padding=((pad, pad), (0, 0)),
        rhs_dilation=(dilation, 1), dimension_numbers=dn, feature_group_count=Cin)
    r = bn_apply(r, bn1)
    r = lax.conv_general_dilated(r, w2.reshape(Cout, 1, 1, K),
        window_strides=(1, stride), padding=((0, 0), (pad, pad)),
        rhs_dilation=(1, dilation), dimension_numbers=dn, feature_group_count=Cin)
    r = bn_apply(r, bn2)

    m = lax.conv_general_dilated(x, w3.reshape(Cint, Cin, 1, 1),
        window_strides=(1, 1), padding=((0, 0), (0, 0)), dimension_numbers=dn)
    m = jax.nn.relu(bn_apply(m, bn3))
    m = lax.conv_general_dilated(m, w4.reshape(Cint, 1, K, 1),
        window_strides=(stride, 1), padding=((pad, pad), (0, 0)),
        rhs_dilation=(dilation, 1), dimension_numbers=dn, feature_group_count=Cint)
    m = bn_apply(m, bn4)
    m = lax.conv_general_dilated(m, w5.reshape(Cint, 1, 1, K),
        window_strides=(1, stride), padding=((0, 0), (pad, pad)),
        rhs_dilation=(1, dilation), dimension_numbers=dn, feature_group_count=Cint)
    m = bn_apply(m, bn5)
    m = lax.conv_general_dilated(m, w6.reshape(Cout, Cint, 1, 1),
        window_strides=(1, 1), padding=((0, 0), (0, 0)), dimension_numbers=dn)
    m = bn_apply(m, bn6)
    return jax.nn.relu(m + r)


if __name__ == "__main__":
    key = jax.random.PRNGKey(0)
    B, Cin, H, W = 2, 8, 16, 16
    Cout = 8                      # grouped conv2 requires Cout % Cin == 0

    kx, kp = jax.random.split(key)
    x = jax.random.normal(kx, (B, Cin, H, W), jnp.float32)
    params = init_params(kp, Cin, Cout, kernel_size=3)

    fwd = jax.jit(functools.partial(dfc_forward, kernel_size=3, stride=1, dilation=1))
    out = jax.block_until_ready(fwd(x, params))

    ref = dfc_reference(x, params, kernel_size=3, stride=1, dilation=1)
    assert out.shape == ref.shape, (out.shape, ref.shape)
    if not jnp.allclose(out, ref, rtol=1e-4, atol=1e-4):
        raise AssertionError(
            f"mismatch vs reference, max abs err = {jnp.max(jnp.abs(out - ref))}")
    print("KERNEL_OK")
</pallas_src>

<mosaic_0001>
module attributes {stable_mosaic.version = 11 : i64} {
  func.func @kernel(%arg0: i32, %arg1: memref<8x512xf32, #tpu.memory_space<vmem>>, %arg2: memref<3x32x512xf32, #tpu.memory_space<vmem>>, %arg3: memref<24x8xf32, #tpu.memory_space<vmem>>, %arg4: memref<48x1xf32, #tpu.memory_space<vmem>>, %arg5: memref<8x512xf32, #tpu.memory_space<vmem>>) attributes {dimension_semantics = [#tpu.dimension_semantics<arbitrary>], iteration_bounds = array<i64: 1>, scalar_prefetch = 0 : i64, scratch_operands = 0 : i64, tpu.core_type = #tpu.core_type<tc>, window_params = [{transform_indices = @transform_0, window_bounds = array<i64: 8, 512>}, {pipeline_mode = #tpu.pipeline_mode<synchronous>, transform_indices = @transform_1, window_bounds = array<i64: 3, 32, 512>}, {pipeline_mode = #tpu.pipeline_mode<synchronous>, transform_indices = @transform_2, window_bounds = array<i64: 24, 8>}, {pipeline_mode = #tpu.pipeline_mode<synchronous>, transform_indices = @transform_3, window_bounds = array<i64: 48, 1>}, {transform_indices = @transform_4, window_bounds = array<i64: 8, 512>}]} {
    %c0 = arith.constant 0 : index
    %c0_0 = arith.constant 0 : index
    %0 = vector.load %arg1[%c0, %c0_0] : memref<8x512xf32, #tpu.memory_space<vmem>>, vector<8x512xf32>
    %c0_1 = arith.constant 0 : index
    %c0_2 = arith.constant 0 : index
    %c0_3 = arith.constant 0 : index
    %1 = vector.load %arg2[%c0_1, %c0_2, %c0_3] : memref<3x32x512xf32, #tpu.memory_space<vmem>>, vector<3x32x512xf32>
    %c0_4 = arith.constant 0 : index
    %c0_5 = arith.constant 0 : index
    %2 = vector.load %arg3[%c0_4, %c0_5] : memref<24x8xf32, #tpu.memory_space<vmem>>, vector<24x8xf32>
    %c0_6 = arith.constant 0 : index
    %c0_7 = arith.constant 0 : index
    %3 = vector.load %arg4[%c0_6, %c0_7] : memref<48x1xf32, #tpu.memory_space<vmem>>, vector<48x1xf32>
    %4 = vector.extract_strided_slice %1 {offsets = [0, 0, 0], sizes = [3, 8, 512], strides = [1, 1, 1]} : vector<3x32x512xf32> to vector<3x8x512xf32>
    %5 = vector.extract_strided_slice %1 {offsets = [0, 8, 0], sizes = [3, 8, 512], strides = [1, 1, 1]} : vector<3x32x512xf32> to vector<3x8x512xf32>
    %6 = vector.extract_strided_slice %1 {offsets = [0, 16, 0], sizes = [3, 2, 512], strides = [1, 1, 1]} : vector<3x32x512xf32> to vector<3x2x512xf32>
    %7 = vector.extract_strided_slice %1 {offsets = [0, 24, 0], sizes = [3, 2, 512], strides = [1, 1, 1]} : vector<3x32x512xf32> to vector<3x2x512xf32>
    %8 = vector.extract_strided_slice %2 {offsets = [0, 0], sizes = [2, 8], strides = [1, 1]} : vector<24x8xf32> to vector<2x8xf32>
    %9 = vector.extract_strided_slice %2 {offsets = [8, 0], sizes = [8, 2], strides = [1, 1]} : vector<24x8xf32> to vector<8x2xf32>
    %10 = vector.extract_strided_slice %3 {offsets = [0, 0], sizes = [8, 1], strides = [1, 1]} : vector<48x1xf32> to vector<8x1xf32>
    %11 = vector.extract_strided_slice %3 {offsets = [8, 0], sizes = [8, 1], strides = [1, 1]} : vector<48x1xf32> to vector<8x1xf32>
    %12 = vector.extract_strided_slice %3 {offsets = [16, 0], sizes = [2, 1], strides = [1, 1]} : vector<48x1xf32> to vector<2x1xf32>
    %13 = vector.extract_strided_slice %3 {offsets = [24, 0], sizes = [2, 1], strides = [1, 1]} : vector<48x1xf32> to vector<2x1xf32>
    %14 = vector.extract_strided_slice %3 {offsets = [32, 0], sizes = [2, 1], strides = [1, 1]} : vector<48x1xf32> to vector<2x1xf32>
    %15 = vector.extract_strided_slice %3 {offsets = [40, 0], sizes = [8, 1], strides = [1, 1]} : vector<48x1xf32> to vector<8x1xf32>
    %cst = arith.constant dense<0.000000e+00> : vector<2x512xf32>
    %16 = tpu.matmul %8, %0, %cst {dimension_numbers = #tpu.dot_dimension_numbers<[1], [0], [0], [1], [0, 0, 1, 1], [], []>} : vector<2x8xf32>, vector<8x512xf32>, vector<2x512xf32> -> vector<2x512xf32>
    %17 = vector.broadcast %12 : vector<2x1xf32> to vector<2x512xf32>
    %18 = arith.addf %16, %17 : vector<2x512xf32>
    %cst_8 = arith.constant 0.000000e+00 : f32
    %19 = vector.broadcast %cst_8 : f32 to vector<2x512xf32>
    %20 = arith.maximumf %18, %19 : vector<2x512xf32>
    %c16_i32 = arith.constant 16 : i32
    %21 = tpu.dynamic_rotate %20 by %c16_i32 dim 1 : vector<2x512xf32>, i32 -> vector<2x512xf32>
    %22 = vector.extract_strided_slice %6 {offsets = [0, 0, 0], sizes = [1, 2, 512], strides = [1, 1, 1]} : vector<3x2x512xf32> to vector<1x2x512xf32>
    %23 = vector.shape_cast %22 : vector<1x2x512xf32> to vector<2x512xf32>
    %24 = arith.mulf %21, %23 : vector<2x512xf32>
    %25 = vector.extract_strided_slice %6 {offsets = [1, 0, 0], sizes = [1, 2, 512], strides = [1, 1, 1]} : vector<3x2x512xf32> to vector<1x2x512xf32>
    %26 = vector.shape_cast %25 : vector<1x2x512xf32> to vector<2x512xf32>
    %27 = arith.mulf %20, %26 : vector<2x512xf32>
    %28 = arith.addf %24, %27 : vector<2x512xf32>
    %c496_i32 = arith.constant 496 : i32
    %29 = tpu.dynamic_rotate %20 by %c496_i32 dim 1 : vector<2x512xf32>, i32 -> vector<2x512xf32>
    %30 = vector.extract_strided_slice %6 {offsets = [2, 0, 0], sizes = [1, 2, 512], strides = [1, 1, 1]} : vector<3x2x512xf32> to vector<1x2x512xf32>
    %31 = vector.shape_cast %30 : vector<1x2x512xf32> to vector<2x512xf32>
    %32 = arith.mulf %29, %31 : vector<2x512xf32>
    %33 = arith.addf %28, %32 : vector<2x512xf32>
    %34 = vector.broadcast %13 : vector<2x1xf32> to vector<2x512xf32>
    %35 = arith.addf %33, %34 : vector<2x512xf32>
    %c1_i32 = arith.constant 1 : i32
    %36 = tpu.dynamic_rotate %35 by %c1_i32 dim 1 : vector<2x512xf32>, i32 -> vector<2x512xf32>
    %37 = vector.extract_strided_slice %7 {offsets = [0, 0, 0], sizes = [1, 2, 512], strides = [1, 1, 1]} : vector<3x2x512xf32> to vector<1x2x512xf32>
    %38 = vector.shape_cast %37 : vector<1x2x512xf32> to vector<2x512xf32>
    %39 = arith.mulf %36, %38 : vector<2x512xf32>
    %40 = vector.extract_strided_slice %7 {offsets = [1, 0, 0], sizes = [1, 2, 512], strides = [1, 1, 1]} : vector<3x2x512xf32> to vector<1x2x512xf32>
    %41 = vector.shape_cast %40 : vector<1x2x512xf32> to vector<2x512xf32>
    %42 = arith.mulf %35, %41 : vector<2x512xf32>
    %43 = arith.addf %39, %42 : vector<2x512xf32>
    %c511_i32 = arith.constant 511 : i32
    %44 = tpu.dynamic_rotate %35 by %c511_i32 dim 1 : vector<2x512xf32>, i32 -> vector<2x512xf32>
    %45 = vector.extract_strided_slice %7 {offsets = [2, 0, 0], sizes = [1, 2, 512], strides = [1, 1, 1]} : vector<3x2x512xf32> to vector<1x2x512xf32>
    %46 = vector.shape_cast %45 : vector<1x2x512xf32> to vector<2x512xf32>
    %47 = arith.mulf %44, %46 : vector<2x512xf32>
    %48 = arith.addf %43, %47 : vector<2x512xf32>
    %49 = vector.broadcast %14 : vector<2x1xf32> to vector<2x512xf32>
    %50 = arith.addf %48, %49 : vector<2x512xf32>
    %cst_9 = arith.constant dense<0.000000e+00> : vector<8x512xf32>
    %51 = tpu.matmul %9, %50, %cst_9 {dimension_numbers = #tpu.dot_dimension_numbers<[1], [0], [0], [1], [0, 0, 1, 1], [], []>} : vector<8x2xf32>, vector<2x512xf32>, vector<8x512xf32> -> vector<8x512xf32>
    %52 = vector.broadcast %15 : vector<8x1xf32> to vector<8x512xf32>
    %53 = arith.addf %51, %52 : vector<8x512xf32>
    %c16_i32_10 = arith.constant 16 : i32
    %54 = tpu.dynamic_rotate %0 by %c16_i32_10 dim 1 : vector<8x512xf32>, i32 -> vector<8x512xf32>
    %55 = vector.extract_strided_slice %4 {offsets = [0, 0, 0], sizes = [1, 8, 512], strides = [1, 1, 1]} : vector<3x8x512xf32> to vector<1x8x512xf32>
    %56 = vector.shape_cast %55 : vector<1x8x512xf32> to vector<8x512xf32>
    %57 = arith.mulf %54, %56 : vector<8x512xf32>
    %58 = vector.extract_strided_slice %4 {offsets = [1, 0, 0], sizes = [1, 8, 512], strides = [1, 1, 1]} : vector<3x8x512xf32> to vector<1x8x512xf32>
    %59 = vector.shape_cast %58 : vector<1x8x512xf32> to vector<8x512xf32>
    %60 = arith.mulf %0, %59 : vector<8x512xf32>
    %61 = arith.addf %57, %60 : vector<8x512xf32>
    %c496_i32_11 = arith.constant 496 : i32
    %62 = tpu.dynamic_rotate %0 by %c496_i32_11 dim 1 : vector<8x512xf32>, i32 -> vector<8x512xf32>
    %63 = vector.extract_strided_slice %4 {offsets = [2, 0, 0], sizes = [1, 8, 512], strides = [1, 1, 1]} : vector<3x8x512xf32> to vector<1x8x512xf32>
    %64 = vector.shape_cast %63 : vector<1x8x512xf32> to vector<8x512xf32>
    %65 = arith.mulf %62, %64 : vector<8x512xf32>
    %66 = arith.addf %61, %65 : vector<8x512xf32>
    %67 = vector.broadcast %10 : vector<8x1xf32> to vector<8x512xf32>
    %68 = arith.addf %66, %67 : vector<8x512xf32>
    %c1_i32_12 = arith.constant 1 : i32
    %69 = tpu.dynamic_rotate %68 by %c1_i32_12 dim 1 : vector<8x512xf32>, i32 -> vector<8x512xf32>
    %70 = vector.extract_strided_slice %5 {offsets = [0, 0, 0], sizes = [1, 8, 512], strides = [1, 1, 1]} : vector<3x8x512xf32> to vector<1x8x512xf32>
    %71 = vector.shape_cast %70 : vector<1x8x512xf32> to vector<8x512xf32>
    %72 = arith.mulf %69, %71 : vector<8x512xf32>
    %73 = vector.extract_strided_slice %5 {offsets = [1, 0, 0], sizes = [1, 8, 512], strides = [1, 1, 1]} : vector<3x8x512xf32> to vector<1x8x512xf32>
    %74 = vector.shape_cast %73 : vector<1x8x512xf32> to vector<8x512xf32>
    %75 = arith.mulf %68, %74 : vector<8x512xf32>
    %76 = arith.addf %72, %75 : vector<8x512xf32>
    %c511_i32_13 = arith.constant 511 : i32
    %77 = tpu.dynamic_rotate %68 by %c511_i32_13 dim 1 : vector<8x512xf32>, i32 -> vector<8x512xf32>
    %78 = vector.extract_strided_slice %5 {offsets = [2, 0, 0], sizes = [1, 8, 512], strides = [1, 1, 1]} : vector<3x8x512xf32> to vector<1x8x512xf32>
    %79 = vector.shape_cast %78 : vector<1x8x512xf32> to vector<8x512xf32>
    %80 = arith.mulf %77, %79 : vector<8x512xf32>
    %81 = arith.addf %76, %80 : vector<8x512xf32>
    %82 = vector.broadcast %11 : vector<8x1xf32> to vector<8x512xf32>
    %83 = arith.addf %81, %82 : vector<8x512xf32>
    %84 = arith.addf %53, %83 : vector<8x512xf32>
    %cst_14 = arith.constant 0.000000e+00 : f32
    %85 = vector.broadcast %cst_14 : f32 to vector<8x512xf32>
    %86 = arith.maximumf %84, %85 : vector<8x512xf32>
    %c0_15 = arith.constant 0 : index
    %c0_16 = arith.constant 0 : index
    %87 = vector.load %arg5[%c0_15, %c0_16] : memref<8x512xf32, #tpu.memory_space<vmem>>, vector<8x512xf32>
    tpu.vector_store %arg5[%c0_15, %c0_16], %86 {strides = array<i32>} : memref<8x512xf32, #tpu.memory_space<vmem>>, vector<8x512xf32>,
    return
  }
  func.func @transform_0(%arg0: i32) -> (i32, i32) {
    %c0_i32 = arith.constant 0 : i32
    %c0_i32_0 = arith.constant 0 : i32
    return %c0_i32, %arg0 : i32, i32
  }
  func.func @transform_1(%arg0: i32) -> (i32, i32, i32) {
    %c0_i32 = arith.constant 0 : i32
    %c0_i32_0 = arith.constant 0 : i32
    %c0_i32_1 = arith.constant 0 : i32
    %c0_i32_2 = arith.constant 0 : i32
    return %c0_i32, %c0_i32_0, %c0_i32_1 : i32, i32, i32
  }
  func.func @transform_2(%arg0: i32) -> (i32, i32) {
    %c0_i32 = arith.constant 0 : i32
    %c0_i32_0 = arith.constant 0 : i32
    %c0_i32_1 = arith.constant 0 : i32
    return %c0_i32, %c0_i32_0 : i32, i32
  }
  func.func @transform_3(%arg0: i32) -> (i32, i32) {
    %c0_i32 = arith.constant 0 : i32
    %c0_i32_0 = arith.constant 0 : i32
    %c0_i32_1 = arith.constant 0 : i32
    return %c0_i32, %c0_i32_0 : i32, i32
  }
  func.func @transform_4(%arg0: i32) -> (i32, i32) {
    %c0_i32 = arith.constant 0 : i32
    %c0_i32_0 = arith.constant 0 : i32
    return %c0_i32, %arg0 : i32, i32
  }
}

</mosaic_0001>

<llo_original>
// kernel: dfc_forward.1
$region0: #{dfc_forward.1}
  #allocation0 [shape = 'u32[]', space=smem, size = 0x4, offset = 0x4, fixed_abs, tag = 'smem constant byte address 0x4 - core index']
  #allocation1 [shape = 'u32[144,128]{1,0:T(1,128)}', space=vmem, size = 0x12000, scoped, tag = 'internal scratch']
  %s0 = inlined_call_operand.vmem [shape: f32[8,512], index: 0, kind: input, shape index: {}]
  %s1 = inlined_call_operand.vmem [shape: f32[3,32,512], index: 1, kind: input, shape index: {}]
  %s2 = inlined_call_operand.vmem [shape: f32[24,8], index: 2, kind: input, shape index: {}]
  %s3 = inlined_call_operand.vmem [shape: f32[48,1], index: 3, kind: input, shape index: {}]
  %s4 = inlined_call_operand.vmem [shape: f32[8,512], index: 4, kind: output, shape index: {}]
  %s5 = sld [smem:[#allocation0]]
  $region26: #{dfc_forward.1} parent=0
    _
  %s7 = ssub.s32 1, %s5
  %s8 = scalar_select 0, %s7, %s5
  // Predicated region
  $region2: #{dfc_forward.1} parent=0 // pred_check
    _
  $region3: #{dfc_forward.1} parent=0 // pred_check_branch
    %10 = sbr.rel (0) target = $region5
  $region4: #{dfc_forward.1} parent=0 // pred_region
    _
  $region5: #{dfc_forward.1} parent=0 // pred_fallthru
    _
  // Predicated region
  $region6: #{dfc_forward.1} parent=0 // pred_check
    _
  $region7: #{dfc_forward.1} parent=0 // pred_check_branch
    %12 = sbr.rel (0) target = $region9
  $region8: #{dfc_forward.1} parent=0 // pred_region
    _
  $region9: #{dfc_forward.1} parent=0 // pred_fallthru
    _
  // Predicated region
  $region10: #{dfc_forward.1} parent=0 // pred_check
    _
  $region11: #{dfc_forward.1} parent=0 // pred_check_branch
    %14 = sbr.rel (0) target = $region13
  $region12: #{dfc_forward.1} parent=0 // pred_region
    _
  $region13: #{dfc_forward.1} parent=0 // pred_fallthru
    _
  // Predicated region
  $region14: #{dfc_forward.1} parent=0 // pred_check
    _
  $region15: #{dfc_forward.1} parent=0 // pred_check_branch
    %16 = sbr.rel (0) target = $region17
  $region16: #{dfc_forward.1} parent=0 // pred_region
    _
  $region17: #{dfc_forward.1} parent=0 // pred_fallthru
    _
  %v17 = vld [vmem:[%s0] sm:$0xff]
  %v18 = vld [vmem:[%s0 + $0x8] sm:$0xff]
  %v19 = vld [vmem:[%s0 + $0x10] sm:$0xff]
  %v20 = vld [vmem:[%s0 + $0x18] sm:$0xff]
  %v21 = vld [vmem:[%s1] sm:$0xff]
  %v22 = vld [vmem:[%s1 + $0x8] sm:$0xff]
  %v23 = vld [vmem:[%s1 + $0x10] sm:$0xff]
  %v24 = vld [vmem:[%s1 + $0x18] sm:$0xff]
  %v25 = vld [vmem:[%s1 + $0x20] sm:$0xff]
  %v26 = vld [vmem:[%s1 + $0x28] sm:$0xff]
  %v27 = vld [vmem:[%s1 + $0x30] sm:$0xff]
  %v28 = vld [vmem:[%s1 + $0x38] sm:$0xff]
  %v29 = vld [vmem:[%s1 + $0x40] sm:$0xff]
  %v30 = vld [vmem:[%s1 + $0x48] sm:$0xff]
  %v31 = vld [vmem:[%s1 + $0x50] sm:$0xff]
  %v32 = vld [vmem:[%s1 + $0x58] sm:$0xff]
  %v33 = vld [vmem:[%s1 + $0x60] sm:$0xff]
  %v34 = vld [vmem:[%s1 + $0x68] sm:$0xff]
  %v35 = vld [vmem:[%s1 + $0x70] sm:$0xff]
  %v36 = vld [vmem:[%s1 + $0x78] sm:$0xff]
  %v37 = vld [vmem:[%s1 + $0x80] sm:$0xff]
  %v38 = vld [vmem:[%s1 + $0x88] sm:$0xff]
  %v39 = vld [vmem:[%s1 + $0x90] sm:$0xff]
  %v40 = vld [vmem:[%s1 + $0x98] sm:$0xff]
  %v41 = vld [vmem:[%s1 + $0xa0] sm:$0xff]
  %v42 = vld [vmem:[%s1 + $0xa8] sm:$0xff]
  %v43 = vld [vmem:[%s1 + $0xb0] sm:$0xff]
  %v44 = vld [vmem:[%s1 + $0xb8] sm:$0xff]
  %v45 = vld [vmem:[%s1 + $0xc0] sm:$0xff]
  %v46 = vld [vmem:[%s1 + $0xc8] sm:$0xff]
  %v47 = vld [vmem:[%s1 + $0xd0] sm:$0xff]
  %v48 = vld [vmem:[%s1 + $0xd8] sm:$0xff]
  %v49 = vld [vmem:[%s1 + $0xe0] sm:$0xff]
  %v50 = vld [vmem:[%s1 + $0xe8] sm:$0xff]
  %v51 = vld [vmem:[%s1 + $0xf0] sm:$0xff]
  %v52 = vld [vmem:[%s1 + $0xf8] sm:$0xff]
  %v53 = vld [vmem:[%s1 + $0x100] sm:$0xff]
  %v54 = vld [vmem:[%s1 + $0x108] sm:$0xff]
  %v55 = vld [vmem:[%s1 + $0x110] sm:$0xff]
  %v56 = vld [vmem:[%s1 + $0x118] sm:$0xff]
  %v57 = vld [vmem:[%s1 + $0x120] sm:$0xff]
  %v58 = vld [vmem:[%s1 + $0x128] sm:$0xff]
  %v59 = vld [vmem:[%s1 + $0x130] sm:$0xff]
  %v60 = vld [vmem:[%s1 + $0x138] sm:$0xff]
  %v61 = vld [vmem:[%s1 + $0x140] sm:$0xff]
  %v62 = vld [vmem:[%s1 + $0x148] sm:$0xff]
  %v63 = vld [vmem:[%s1 + $0x150] sm:$0xff]
  %v64 = vld [vmem:[%s1 + $0x158] sm:$0xff]
  %v65 = vld [vmem:[%s1 + $0x160] sm:$0xff]
  %v66 = vld [vmem:[%s1 + $0x168] sm:$0xff]
  %v67 = vld [vmem:[%s1 + $0x170] sm:$0xff]
  %v68 = vld [vmem:[%s1 + $0x178] sm:$0xff]
  %v69 = vld [vmem:[%s2] sm:$0xff]
  %v70 = vld [vmem:[%s2 + $0x8] sm:$0xff]
  %v71 = vld [vmem:[%s3] sm:$0xff]
  %v72 = vld [vmem:[%s3 + $0x8] sm:$0xff]
  %v73 = vld [vmem:[%s3 + $0x10] sm:$0xff]
  %v74 = vld [vmem:[%s3 + $0x18] sm:$0xff]
  %v75 = vld [vmem:[%s3 + $0x20] sm:$0xff]
  %v76 = vld [vmem:[%s3 + $0x28] sm:$0xff]
  %78 = vset.pattern.permute.xlu0 0
  %79 = vperm.xlu0 %78, %v73
  %v80 = vpop.permute.xlu0 %79
  %vm82 = vcmask 64512
  %v84 = vsel %vm82, %v69, 0
  %86 = vmatprep.subr.mxu0 %v18
  %87 = vmatpush1.msra.mxu0 %v17
  %88 = vmatprep.subr.mxu0 0.0
  %89 = vmatpush1.msra.mxu0 0.0
  %90 = vmatprep.subr.mxu0 0.0
  %91 = vmatpush1.msra.mxu0 0.0
  %92 = vmatprep.subr.mxu0 0.0
  %93 = vmatpush1.msra.mxu0 0.0
  %94 = vmatprep.subr.mxu0 0.0
  %95 = vmatpush1.msra.mxu0 0.0
  %96 = vmatprep.subr.mxu0 0.0
  %97 = vmatpush1.msra.mxu0 0.0
  %98 = vmatprep.subr.mxu0 0.0
  %99 = vmatpush1.msra.mxu0 0.0
  %100 = vmatprep.subr.mxu0 0.0
  %101 = vmatpush1.msra.mxu0 0.0
  %102 = vmatprep.subr.mxu0 0.0
  %103 = vmatpush1.msra.mxu0 0.0
  %104 = vmatprep.subr.mxu0 0.0
  %105 = vmatpush1.msra.mxu0 0.0
  %106 = vmatprep.subr.mxu0 0.0
  %107 = vmatpush1.msra.mxu0 0.0
  %108 = vmatprep.subr.mxu0 0.0
  %109 = vmatpush1.msra.mxu0 0.0
  %110 = vmatprep.subr.mxu0 0.0
  %111 = vmatpush1.msra.mxu0 0.0
  %112 = vmatprep.subr.mxu0 0.0
  %113 = vmatpush1.msra.mxu0 0.0
  %114 = vmatprep.subr.mxu0 0.0
  %115 = vmatpush1.msra.mxu0 0.0
  %116 = vmatprep.subr.mxu0 0.0
  %117 = vmatpush1.msra.mxu0 0.0
  %118 = vmatprep.subr.mxu0 0.0
  %119 = vmatpush1.msra.mxu0 0.0
  %120 = vmatprep.subr.mxu0 0.0
  %121 = vmatpush1.msra.mxu0 0.0
  %122 = vmatprep.subr.mxu0 0.0
  %123 = vmatpush1.msra.mxu0 0.0
  %124 = vmatprep.subr.mxu0 0.0
  %125 = vmatpush1.msra.mxu0 0.0
  %126 = vmatprep.subr.mxu0 0.0
  %127 = vmatpush1.msra.mxu0 0.0
  %128 = vmatprep.subr.mxu0 0.0
  %129 = vmatpush1.msra.mxu0 0.0
  %130 = vmatprep.subr.mxu0 0.0
  %131 = vmatpush1.msra.mxu0 0.0
  %132 = vmatprep.subr.mxu0 0.0
  %133 = vmatpush1.msra.mxu0 0.0
  %134 = vmatprep.subr.mxu0 0.0
  %135 = vmatpush1.msra.mxu0 0.0
  %136 = vmatprep.subr.mxu0 0.0
  %137 = vmatpush1.msra.mxu0 0.0
  %138 = vmatprep.subr.mxu0 0.0
  %139 = vmatpush1.msra.mxu0 0.0
  %140 = vmatprep.subr.mxu0 0.0
  %141 = vmatpush1.msra.mxu0 0.0
  %142 = vmatprep.subr.mxu0 0.0
  %143 = vmatpush1.msra.mxu0 0.0
  %144 = vmatprep.subr.mxu0 0.0
  %145 = vmatpush1.msra.mxu0 0.0
  %146 = vmatprep.subr.mxu0 0.0
  %147 = vmatpush1.msra.mxu0 0.0
  %148 = vmatprep.subr.mxu0 0.0
  %149 = vmatpush1.msra.mxu0 0.0
  %150 = vmatprep.mubr.f32.mxu0 0.0
  %151 = vmatmul.mubr.f32.gmra.mrb[0].mxu0 %v84
  %v152 = vpop.f32.mrb[0].mxu0
  %v153 = vadd.f32 %v80, %v152
  %v154 = vpop.f32.mrb[0].mxu0
  %v155 = vadd.f32 %v80, %v154
  %156 = vdwg.mxu0
  %157 = vmatprep.subr.mxu0 %v20
  %158 = vmatpush1.msra.mxu0 %v19
  %159 = vmatprep.subr.mxu0 0.0
  %160 = vmatpush1.msra.mxu0 0.0
  %161 = vmatprep.subr.mxu0 0.0
  %162 = vmatpush1.msra.mxu0 0.0
  %163 = vmatprep.subr.mxu0 0.0
  %164 = vmatpush1.msra.mxu0 0.0
  %165 = vmatprep.subr.mxu0 0.0
  %166 = vmatpush1.msra.mxu0 0.0
  %167 = vmatprep.subr.mxu0 0.0
  %168 = vmatpush1.msra.mxu0 0.0
  %169 = vmatprep.subr.mxu0 0.0
  %170 = vmatpush1.msra.mxu0 0.0
  %171 = vmatprep.subr.mxu0 0.0
  %172 = vmatpush1.msra.mxu0 0.0
  %173 = vmatprep.subr.mxu0 0.0
  %174 = vmatpush1.msra.mxu0 0.0
  %175 = vmatprep.subr.mxu0 0.0
  %176 = vmatpush1.msra.mxu0 0.0
  %177 = vmatprep.subr.mxu0 0.0
  %178 = vmatpush1.msra.mxu0 0.0
  %179 = vmatprep.subr.mxu0 0.0
  %180 = vmatpush1.msra.mxu0 0.0
  %181 = vmatprep.subr.mxu0 0.0
  %182 = vmatpush1.msra.mxu0 0.0
  %183 = vmatprep.subr.mxu0 0.0
  %184 = vmatpush1.msra.mxu0 0.0
  %185 = vmatprep.subr.mxu0 0.0
  %186 = vmatpush1.msra.mxu0 0.0
  %187 = vmatprep.subr.mxu0 0.0
  %188 = vmatpush1.msra.mxu0 0.0
  %189 = vmatprep.subr.mxu0 0.0
  %190 = vmatpush1.msra.mxu0 0.0
  %191 = vmatprep.subr.mxu0 0.0
  %192 = vmatpush1.msra.mxu0 0.0
  %193 = vmatprep.subr.mxu0 0.0
  %194 = vmatpush1.msra.mxu0 0.0
  %195 = vmatprep.subr.mxu0 0.0
  %196 = vmatpush1.msra.mxu0 0.0
  %197 = vmatprep.subr.mxu0 0.0
  %198 = vmatpush1.msra.mxu0 0.0
  %199 = vmatprep.subr.mxu0 0.0
  %200 = vmatpush1.msra.mxu0 0.0
  %201 = vmatprep.subr.mxu0 0.0
  %202 = vmatpush1.msra.mxu0 0.0
  %203 = vmatprep.subr.mxu0 0.0
  %204 = vmatpush1.msra.mxu0 0.0
  %205 = vmatprep.subr.mxu0 0.0
  %206 = vmatpush1.msra.mxu0 0.0
  %207 = vmatprep.subr.mxu0 0.0
  %208 = vmatpush1.msra.mxu0 0.0
  %209 = vmatprep.subr.mxu0 0.0
  %210 = vmatpush1.msra.mxu0 0.0
  %211 = vmatprep.subr.mxu0 0.0
  %212 = vmatpush1.msra.mxu0 0.0
  %213 = vmatprep.subr.mxu0 0.0
  %214 = vmatpush1.msra.mxu0 0.0
  %215 = vmatprep.subr.mxu0 0.0
  %216 = vmatpush1.msra.mxu0 0.0
  %217 = vmatprep.subr.mxu0 0.0
  %218 = vmatpush1.msra.mxu0 0.0
  %219 = vmatprep.subr.mxu0 0.0
  %220 = vmatpush1.msra.mxu0 0.0
  %221 = vmatprep.mubr.f32.mxu0 0.0
  %222 = vmatmul.mubr.f32.gmra.mrb[0].mxu0 %v84
  %v223 = vpop.f32.mrb[0].mxu0
  %v224 = vadd.f32 %v80, %v223
  %v225 = vpop.f32.mrb[0].mxu0
  %v226 = vadd.f32 %v80, %v225
  %227 = vdwg.mxu0
  %v228 = vmax.f32 %v153, 0.0
  %v229 = vmax.f32 %v155, 0.0
  %v230 = vmax.f32 %v224, 0.0
  %v231 = vmax.f32 %v226, 0.0
  %232 = vrot.lane.b32.xlu0 %v228, 16
  %v233 = vpop.permute.xlu0 %232
  %234 = vrot.lane.b32.xlu0 %v229, 16
  %v235 = vpop.permute.xlu0 %234
  %236 = vrot.lane.b32.xlu0 %v230, 16
  %v237 = vpop.permute.xlu0 %236
  %238 = vrot.lane.b32.xlu0 %v231, 16
  %v239 = vpop.permute.xlu0 %238
  %v240 = vlaneseq
  %v241 = vand.u32 %v240, 127
  %vm242 = vcmp.lt.s32.totalorder %v241, 16
  %v243 = vsel %vm242, %v237, %v239
  %v244 = vsel %vm242, %v235, %v237
  %v245 = vsel %vm242, %v233, %v235
  %v246 = vsel %vm242, %v239, %v233
  %v247 = vmul.f32 %v246, %v29
  %v248 = vmul.f32 %v245, %v30
  %v249 = vmul.f32 %v244, %v31
  %v250 = vmul.f32 %v243, %v32
  %v251 = vmul.f32 %v228, %v45
  %v252 = vmul.f32 %v229, %v46
  %v253 = vmul.f32 %v230, %v47
  %v254 = vmul.f32 %v231, %v48
  %v255 = vadd.f32 %v247, %v251
  %v256 = vadd.f32 %v248, %v252
  %v257 = vadd.f32 %v249, %v253
  %v258 = vadd.f32 %v250, %v254
  %259 = vrot.lane.b32.xlu0 %v228, 112
  %v260 = vpop.permute.xlu0 %259
  %261 = vrot.lane.b32.xlu0 %v229, 112
  %v262 = vpop.permute.xlu0 %261
  %263 = vrot.lane.b32.xlu0 %v230, 112
  %v264 = vpop.permute.xlu0 %263
  %265 = vrot.lane.b32.xlu0 %v231, 112
  %v266 = vpop.permute.xlu0 %265
  %vm267 = vcmp.lt.s32.totalorder %v241, 112
  %v268 = vsel %vm267, %v264, %v266
  %v269 = vsel %vm267, %v262, %v264
  %v270 = vsel %vm267, %v260, %v262
  %v271 = vsel %vm267, %v266, %v260
  %v272 = vmul.f32 %v270, %v61
  %v273 = vmul.f32 %v269, %v62
  %v274 = vmul.f32 %v268, %v63
  %v275 = vmul.f32 %v271, %v64
  %v276 = vadd.f32 %v255, %v272
  %v277 = vadd.f32 %v256, %v273
  %v278 = vadd.f32 %v257, %v274
  %v279 = vadd.f32 %v258, %v275
  %281 = vset.pattern.permute.xlu0 0
  %282 = vperm.xlu0 %281, %v74
  %v283 = vpop.permute.xlu0 %282
  %v285 = vadd.f32 %v276, %v283
  %v286 = vadd.f32 %v277, %v283
  %v287 = vadd.f32 %v278, %v283
  %v288 = vadd.f32 %v279, %v283
  %289 = vrot.lane.b32.xlu0 %v285, 1
  %v290 = vpop.permute.xlu0 %289
  %291 = vrot.lane.b32.xlu0 %v286, 1
  %v292 = vpop.permute.xlu0 %291
  %293 = vrot.lane.b32.xlu0 %v287, 1
  %v294 = vpop.permute.xlu0 %293
  %295 = vrot.lane.b32.xlu0 %v288, 1
  %v296 = vpop.permute.xlu0 %295
  %vm297 = vcmp.lt.s32.totalorder %v241, 1
  %v298 = vsel %vm297, %v294, %v296
  %v299 = vsel %vm297, %v292, %v294
  %v300 = vsel %vm297, %v290, %v292
  %v301 = vsel %vm297, %v296, %v290
  %v302 = vmul.f32 %v301, %v33
  %v303 = vmul.f32 %v300, %v34
  %v304 = vmul.f32 %v299, %v35
  %v305 = vmul.f32 %v298, %v36
  %v306 = vmul.f32 %v285, %v49
  %v307 = vmul.f32 %v286, %v50
  %v308 = vmul.f32 %v287, %v51
  %v309 = vmul.f32 %v288, %v52
  %v310 = vadd.f32 %v302, %v306
  %v311 = vadd.f32 %v303, %v307
  %v312 = vadd.f32 %v304, %v308
  %v313 = vadd.f32 %v305, %v309
  %314 = vrot.lane.b32.xlu0 %v285, 127
  %v315 = vpop.permute.xlu0 %314
  %316 = vrot.lane.b32.xlu0 %v286, 127
  %v317 = vpop.permute.xlu0 %316
  %318 = vrot.lane.b32.xlu0 %v287, 127
  %v319 = vpop.permute.xlu0 %318
  %320 = vrot.lane.b32.xlu0 %v288, 127
  %v321 = vpop.permute.xlu0 %320
  %vm322 = vcmp.lt.s32.totalorder %v241, 127
  %v323 = vsel %vm322, %v319, %v321
  %v324 = vsel %vm322, %v317, %v319
  %v325 = vsel %vm322, %v315, %v317
  %v326 = vsel %vm322, %v321, %v315
  %v327 = vmul.f32 %v325, %v65
  %v328 = vmul.f32 %v324, %v66
  %v329 = vmul.f32 %v323, %v67
  %v330 = vmul.f32 %v326, %v68
  %v331 = vadd.f32 %v310, %v327
  %v332 = vadd.f32 %v311, %v328
  %v333 = vadd.f32 %v312, %v329
  %v334 = vadd.f32 %v313, %v330
  %336 = vset.pattern.permute.xlu0 0
  %337 = vperm.xlu0 %336, %v75
  %v338 = vpop.permute.xlu0 %337
  %v340 = vadd.f32 %v331, %v338
  %v341 = vadd.f32 %v332, %v338
  %v342 = vadd.f32 %v333, %v338
  %v343 = vadd.f32 %v334, %v338
  %345 = vset.pattern.permute.xlu0 0
  %346 = vperm.xlu0 %345, %v76
  %v347 = vpop.permute.xlu0 %346
  %vm349 = vcmask 15360
  %v351 = vsel %vm349, %v70, 0
  %vm353 = vcmask 1041408
  %v355 = vsel %vm353, %v340, 0
  %v358 = vsel %vm353, %v341, 0
  %v361 = vsel %vm353, %v342, 0
  %v364 = vsel %vm353, %v343, 0
  %366 = vmatprep.subr.mxu0 %v358
  %367 = vmatpush1.msra.mxu0 %v355
  %368 = vmatprep.subr.mxu0 0.0
  %369 = vmatpush1.msra.mxu0 0.0
  %370 = vmatprep.subr.mxu0 0.0
  %371 = vmatpush1.msra.mxu0 0.0
  %372 = vmatprep.subr.mxu0 0.0
  %373 = vmatpush1.msra.mxu0 0.0
  %374 = vmatprep.subr.mxu0 0.0
  %375 = vmatpush1.msra.mxu0 0.0
  %376 = vmatprep.subr.mxu0 0.0
  %377 = vmatpush1.msra.mxu0 0.0
  %378 = vmatprep.subr.mxu0 0.0
  %379 = vmatpush1.msra.mxu0 0.0
  %380 = vmatprep.subr.mxu0 0.0
  %381 = vmatpush1.msra.mxu0 0.0
  %382 = vmatprep.subr.mxu0 0.0
  %383 = vmatpush1.msra.mxu0 0.0
  %384 = vmatprep.subr.mxu0 0.0
  %385 = vmatpush1.msra.mxu0 0.0
  %386 = vmatprep.subr.mxu0 0.0
  %387 = vmatpush1.msra.mxu0 0.0
  %388 = vmatprep.subr.mxu0 0.0
  %389 = vmatpush1.msra.mxu0 0.0
  %390 = vmatprep.subr.mxu0 0.0
  %391 = vmatpush1.msra.mxu0 0.0
  %392 = vmatprep.subr.mxu0 0.0
  %393 = vmatpush1.msra.mxu0 0.0
  %394 = vmatprep.subr.mxu0 0.0
  %395 = vmatpush1.msra.mxu0 0.0
  %396 = vmatprep.subr.mxu0 0.0
  %397 = vmatpush1.msra.mxu0 0.0
  %398 = vmatprep.subr.mxu0 0.0
  %399 = vmatpush1.msra.mxu0 0.0
  %400 = vmatprep.subr.mxu0 0.0
  %401 = vmatpush1.msra.mxu0 0.0
  %402 = vmatprep.subr.mxu0 0.0
  %403 = vmatpush1.msra.mxu0 0.0
  %404 = vmatprep.subr.mxu0 0.0
  %405 = vmatpush1.msra.mxu0 0.0
  %406 = vmatprep.subr.mxu0 0.0
  %407 = vmatpush1.msra.mxu0 0.0
  %408 = vmatprep.subr.mxu0 0.0
  %409 = vmatpush1.msra.mxu0 0.0
  %410 = vmatprep.subr.mxu0 0.0
  %411 = vmatpush1.msra.mxu0 0.0
  %412 = vmatprep.subr.mxu0 0.0
  %413 = vmatpush1.msra.mxu0 0.0
  %414 = vmatprep.subr.mxu0 0.0
  %415 = vmatpush1.msra.mxu0 0.0
  %416 = vmatprep.subr.mxu0 0.0
  %417 = vmatpush1.msra.mxu0 0.0
  %418 = vmatprep.subr.mxu0 0.0
  %419 = vmatpush1.msra.mxu0 0.0
  %420 = vmatprep.subr.mxu0 0.0
  %421 = vmatpush1.msra.mxu0 0.0
  %422 = vmatprep.subr.mxu0 0.0
  %423 = vmatpush1.msra.mxu0 0.0
  %424 = vmatprep.subr.mxu0 0.0
  %425 = vmatpush1.msra.mxu0 0.0
  %426 = vmatprep.subr.mxu0 0.0
  %427 = vmatpush1.msra.mxu0 0.0
  %428 = vmatprep.subr.mxu0 0.0
  %429 = vmatpush1.msra.mxu0 0.0
  %430 = vmatprep.mubr.f32.mxu0 0.0
  %431 = vmatmul.mubr.f32.gmra.mrb[0].mxu0 %v351
  %v432 = vpop.f32.mrb[0].mxu0
  %v433 = vadd.f32 %v347, %v432
  %v434 = vpop.f32.mrb[0].mxu0
  %v435 = vadd.f32 %v347, %v434
  %436 = vdwg.mxu0
  %437 = vmatprep.subr.mxu0 %v364
  %438 = vmatpush1.msra.mxu0 %v361
  %439 = vmatprep.subr.mxu0 0.0
  %440 = vmatpush1.msra.mxu0 0.0
  %441 = vmatprep.subr.mxu0 0.0
  %442 = vmatpush1.msra.mxu0 0.0
  %443 = vmatprep.subr.mxu0 0.0
  %444 = vmatpush1.msra.mxu0 0.0
  %445 = vmatprep.subr.mxu0 0.0
  %446 = vmatpush1.msra.mxu0 0.0
  %447 = vmatprep.subr.mxu0 0.0
  %448 = vmatpush1.msra.mxu0 0.0
  %449 = vmatprep.subr.mxu0 0.0
  %450 = vmatpush1.msra.mxu0 0.0
  %451 = vmatprep.subr.mxu0 0.0
  %452 = vmatpush1.msra.mxu0 0.0
  %453 = vmatprep.subr.mxu0 0.0
  %454 = vmatpush1.msra.mxu0 0.0
  %455 = vmatprep.subr.mxu0 0.0
  %456 = vmatpush1.msra.mxu0 0.0
  %457 = vmatprep.subr.mxu0 0.0
  %458 = vmatpush1.msra.mxu0 0.0
  %459 = vmatprep.subr.mxu0 0.0
  %460 = vmatpush1.msra.mxu0 0.0
  %461 = vmatprep.subr.mxu0 0.0
  %462 = vmatpush1.msra.mxu0 0.0
  %463 = vmatprep.subr.mxu0 0.0
  %464 = vmatpush1.msra.mxu0 0.0
  %465 = vmatprep.subr.mxu0 0.0
  %466 = vmatpush1.msra.mxu0 0.0
  %467 = vmatprep.subr.mxu0 0.0
  %468 = vmatpush1.msra.mxu0 0.0
  %469 = vmatprep.subr.mxu0 0.0
  %470 = vmatpush1.msra.mxu0 0.0
  %471 = vmatprep.subr.mxu0 0.0
  %472 = vmatpush1.msra.mxu0 0.0
  %473 = vmatprep.subr.mxu0 0.0
  %474 = vmatpush1.msra.mxu0 0.0
  %475 = vmatprep.subr.mxu0 0.0
  %476 = vmatpush1.msra.mxu0 0.0
  %477 = vmatprep.subr.mxu0 0.0
  %478 = vmatpush1.msra.mxu0 0.0
  %479 = vmatprep.subr.mxu0 0.0
  %480 = vmatpush1.msra.mxu0 0.0
  %481 = vmatprep.subr.mxu0 0.0
  %482 = vmatpush1.msra.mxu0 0.0
  %483 = vmatprep.subr.mxu0 0.0
  %484 = vmatpush1.msra.mxu0 0.0
  %485 = vmatprep.subr.mxu0 0.0
  %486 = vmatpush1.msra.mxu0 0.0
  %487 = vmatprep.subr.mxu0 0.0
  %488 = vmatpush1.msra.mxu0 0.0
  %489 = vmatprep.subr.mxu0 0.0
  %490 = vmatpush1.msra.mxu0 0.0
  %491 = vmatprep.subr.mxu0 0.0
  %492 = vmatpush1.msra.mxu0 0.0
  %493 = vmatprep.subr.mxu0 0.0
  %494 = vmatpush1.msra.mxu0 0.0
  %495 = vmatprep.subr.mxu0 0.0
  %496 = vmatpush1.msra.mxu0 0.0
  %497 = vmatprep.subr.mxu0 0.0
  %498 = vmatpush1.msra.mxu0 0.0
  %499 = vmatprep.subr.mxu0 0.0
  %500 = vmatpush1.msra.mxu0 0.0
  %501 = vmatprep.mubr.f32.mxu0 0.0
  %502 = vmatmul.mubr.f32.gmra.mrb[0].mxu0 %v351
  %v503 = vpop.f32.mrb[0].mxu0
  %v504 = vadd.f32 %v347, %v503
  %v505 = vpop.f32.mrb[0].mxu0
  %v506 = vadd.f32 %v347, %v505
  %507 = vdwg.mxu0
  %508 = vrot.lane.b32.xlu0 %v17, 16
  %v509 = vpop.permute.xlu0 %508
  %510 = vrot.lane.b32.xlu0 %v18, 16
  %v511 = vpop.permute.xlu0 %510
  %512 = vrot.lane.b32.xlu0 %v19, 16
  %v513 = vpop.permute.xlu0 %512
  %514 = vrot.lane.b32.xlu0 %v20, 16
  %v515 = vpop.permute.xlu0 %514
  %v516 = vsel %vm242, %v513, %v515
  %v517 = vsel %vm242, %v511, %v513
  %v518 = vsel %vm242, %v509, %v511
  %v519 = vsel %vm242, %v515, %v509
  %v520 = vmul.f32 %v519, %v21
  %v521 = vmul.f32 %v518, %v22
  %v522 = vmul.f32 %v517, %v23
  %v523 = vmul.f32 %v516, %v24
  %v524 = vmul.f32 %v17, %v37
  %v525 = vmul.f32 %v18, %v38
  %v526 = vmul.f32 %v19, %v39
  %v527 = vmul.f32 %v20, %v40
  %v528 = vadd.f32 %v520, %v524
  %v529 = vadd.f32 %v521, %v525
  %v530 = vadd.f32 %v522, %v526
  %v531 = vadd.f32 %v523, %v527
  %532 = vrot.lane.b32.xlu0 %v17, 112
  %v533 = vpop.permute.xlu0 %532
  %534 = vrot.lane.b32.xlu0 %v18, 112
  %v535 = vpop.permute.xlu0 %534
  %536 = vrot.lane.b32.xlu0 %v19, 112
  %v537 = vpop.permute.xlu0 %536
  %538 = vrot.lane.b32.xlu0 %v20, 112
  %v539 = vpop.permute.xlu0 %538
  %v540 = vsel %vm267, %v537, %v539
  %v541 = vsel %vm267, %v535, %v537
  %v542 = vsel %vm267, %v533, %v535
  %v543 = vsel %vm267, %v539, %v533
  %v544 = vmul.f32 %v542, %v53
  %v545 = vmul.f32 %v541, %v54
  %v546 = vmul.f32 %v540, %v55
  %v547 = vmul.f32 %v543, %v56
  %v548 = vadd.f32 %v528, %v544
  %v549 = vadd.f32 %v529, %v545
  %v550 = vadd.f32 %v530, %v546
  %v551 = vadd.f32 %v531, %v547
  %553 = vset.pattern.permute.xlu0 0
  %554 = vperm.xlu0 %553, %v71
  %v555 = vpop.permute.xlu0 %554
  %v557 = vadd.f32 %v548, %v555
  %v558 = vadd.f32 %v549, %v555
  %v559 = vadd.f32 %v550, %v555
  %v560 = vadd.f32 %v551, %v555
  %561 = vrot.lane.b32.xlu0 %v557, 1
  %v562 = vpop.permute.xlu0 %561
  %563 = vrot.lane.b32.xlu0 %v558, 1
  %v564 = vpop.permute.xlu0 %563
  %565 = vrot.lane.b32.xlu0 %v559, 1
  %v566 = vpop.permute.xlu0 %565
  %567 = vrot.lane.b32.xlu0 %v560, 1
  %v568 = vpop.permute.xlu0 %567
  %v569 = vsel %vm297, %v566, %v568
  %v570 = vsel %vm297, %v564, %v566
  %v571 = vsel %vm297, %v562, %v564
  %v572 = vsel %vm297, %v568, %v562
  %v573 = vmul.f32 %v572, %v25
  %v574 = vmul.f32 %v571, %v26
  %v575 = vmul.f32 %v570, %v27
  %v576 = vmul.f32 %v569, %v28
  %v577 = vmul.f32 %v557, %v41
  %v578 = vmul.f32 %v558, %v42
  %v579 = vmul.f32 %v559, %v43
  %v580 = vmul.f32 %v560, %v44
  %v581 = vadd.f32 %v573, %v577
  %v582 = vadd.f32 %v574, %v578
  %v583 = vadd.f32 %v575, %v579
  %v584 = vadd.f32 %v576, %v580
  %585 = vrot.lane.b32.xlu0 %v557, 127
  %v586 = vpop.permute.xlu0 %585
  %587 = vrot.lane.b32.xlu0 %v558, 127
  %v588 = vpop.permute.xlu0 %587
  %589 = vrot.lane.b32.xlu0 %v559, 127
  %v590 = vpop.permute.xlu0 %589
  %591 = vrot.lane.b32.xlu0 %v560, 127
  %v592 = vpop.permute.xlu0 %591
  %v593 = vsel %vm322, %v590, %v592
  %v594 = vsel %vm322, %v588, %v590
  %v595 = vsel %vm322, %v586, %v588
  %v596 = vsel %vm322, %v592, %v586
  %v597 = vmul.f32 %v595, %v57
  %v598 = vmul.f32 %v594, %v58
  %v599 = vmul.f32 %v593, %v59
  %v600 = vmul.f32 %v596, %v60
  %v601 = vadd.f32 %v581, %v597
  %v602 = vadd.f32 %v582, %v598
  %v603 = vadd.f32 %v583, %v599
  %v604 = vadd.f32 %v584, %v600
  %606 = vset.pattern.permute.xlu0 0
  %607 = vperm.xlu0 %606, %v72
  %v608 = vpop.permute.xlu0 %607
  %v610 = vadd.f32 %v601, %v608
  %v611 = vadd.f32 %v602, %v608
  %v612 = vadd.f32 %v603, %v608
  %v613 = vadd.f32 %v604, %v608
  %v614 = vadd.f32 %v433, %v610
  %v615 = vadd.f32 %v435, %v611
  %v616 = vadd.f32 %v504, %v612
  %v617 = vadd.f32 %v506, %v613
  %v618 = vmax.f32 %v614, 0.0
  %v619 = vmax.f32 %v615, 0.0
  %v620 = vmax.f32 %v616, 0.0
  %v621 = vmax.f32 %v617, 0.0
  %622 = vst [vmem:[%s4] sm:$0xff] %v618
  %623 = vst [vmem:[%s4 + $0x8] sm:$0xff] %v619
  %624 = vst [vmem:[%s4 + $0x10] sm:$0xff] %v620
  %625 = vst [vmem:[%s4 + $0x18] sm:$0xff] %v621
  // Predicated region
  $region18: #{dfc_forward.1} parent=0 // pred_check
    _
  $region19: #{dfc_forward.1} parent=0 // pred_check_branch
    %627 = sbr.rel (0) target = $region21
  $region20: #{dfc_forward.1} parent=0 // pred_region
    _
  $region21: #{dfc_forward.1} parent=0 // pred_fallthru
    _
  // Predicated region
  $region22: #{dfc_forward.1} parent=0 // pred_check
    _
  $region23: #{dfc_forward.1} parent=0 // pred_check_branch
    %629 = sbr.rel (0) target = $region25
  $region24: #{dfc_forward.1} parent=0 // pred_region
    _
  $region25: #{dfc_forward.1} parent=0 // pred_fallthru
    _

</llo_original>
